<compile_context>
chip_gen: v7x
topology: tpu7x:2x2x1
jax: 0.10.0
libtpu: 0.0.40
codegen_flags: <defaults>
</compile_context>

<pallas_src>
import functools

import jax
import jax.numpy as jnp
from jax import lax
from jax.experimental import pallas as pl
from jax.experimental.pallas import tpu as pltpu


# --------------------------------------------------------------------------- #
# Helpers
# --------------------------------------------------------------------------- #
def _cdiv(a, b):
    return -(-a // b)


def _round_up(a, m):
    return _cdiv(a, m) * m


def _sublane_multiple(*dtypes):
    """Dtype-native sublane multiple: 8 (f32), 16 (bf16), 32 (int8/fp8)."""
    min_item = min(jnp.dtype(d).itemsize for d in dtypes)
    return max(8, 8 * (4 // max(1, min_item)))


# Whole double-buffered pipeline footprint target (v5e-safe: 16 MiB default
# scoped VMEM; also leaves ample headroom under v7x's 64 MiB per-TC VMEM).
_FOOTPRINT_BUDGET = 12 * 1024 * 1024


def _choose_tm(rows, per_row_bytes, sub):
    """Row tile sized from the pipeline VMEM budget; >=2 tiles when possible."""
    if rows <= sub:
        return rows                                    # one full-extent block
    tm_cap = _FOOTPRINT_BUDGET // (2 * max(1, per_row_bytes))
    tm_cap = max(sub, (tm_cap // sub) * sub)
    num_tiles = max(2, _cdiv(rows, tm_cap))            # feed both TCs on v7x
    tm = _round_up(_cdiv(rows, num_tiles), sub)
    return min(tm, _round_up(rows, sub))


# --------------------------------------------------------------------------- #
# Kernels
# --------------------------------------------------------------------------- #
def _mse_sum_kernel(*refs, has_weight, total_rows, mask_tail):
    """One row tile: per-tile (1, 1, C) partial of sum((p - t)^2 [* w])."""
    if has_weight:
        p_ref, t_ref, w_ref, part_ref = refs
    else:
        p_ref, t_ref, part_ref = refs
    d = p_ref[...].astype(jnp.float32) - t_ref[...].astype(jnp.float32)
    sq = d * d
    if has_weight:
        sq = sq * w_ref[...].astype(jnp.float32)        # (tm, C) * (tm, 1)
    if mask_tail:
        tm = sq.shape[0]
        row = pl.program_id(0) * tm + lax.broadcasted_iota(jnp.int32, sq.shape, 0)
        sq = jnp.where(row < total_rows, sq, 0.0)       # zero OOB tail rows
    # Sublane (row-axis) partial only: cheap vreg adds, no cross-lane reduce,
    # no scalar splat.  Final reduction happens in the wrapper.
    part_ref[...] = jnp.sum(sq, axis=0, keepdims=True)[None]


def _mse_none_kernel(*refs, has_weight):
    """One row tile: elementwise (p - t)^2 [* w]; OOB tail rows dropped on store."""
    if has_weight:
        p_ref, t_ref, w_ref, o_ref = refs
    else:
        p_ref, t_ref, o_ref = refs
    d = p_ref[...].astype(jnp.float32) - t_ref[...].astype(jnp.float32)
    sq = d * d
    if has_weight:
        sq = sq * w_ref[...].astype(jnp.float32)
    o_ref[...] = sq.astype(o_ref.dtype)


# --------------------------------------------------------------------------- #
# pallas_call cores
# --------------------------------------------------------------------------- #
@functools.partial(jax.jit, static_argnames=("tm", "vmem_bytes"))
def _mse_sum_core(x2, y2, w_col, *, tm, vmem_bytes):
    rows, C = x2.shape
    grid_n = _cdiv(rows, tm)
    has_w = w_col is not None
    kernel = functools.partial(
        _mse_sum_kernel, has_weight=has_w, total_rows=rows,
        mask_tail=(rows % tm != 0))
    in_specs = [pl.BlockSpec((tm, C), lambda i: (i, 0)),
                pl.BlockSpec((tm, C), lambda i: (i, 0))]
    args = (x2, y2)
    if has_w:
        in_specs.append(pl.BlockSpec((tm, 1), lambda i: (i, 0)))
        args = (x2, y2, w_col)
    partials = pl.pallas_call(
        kernel,
        out_shape=jax.ShapeDtypeStruct((grid_n, 1, C), jnp.float32),
        grid_spec=pltpu.PrefetchScalarGridSpec(
            num_scalar_prefetch=0,
            grid=(grid_n,),
            in_specs=in_specs,
            out_specs=pl.BlockSpec((1, 1, C), lambda i: (i, 0, 0)),
        ),
        compiler_params=pltpu.CompilerParams(
            dimension_semantics=("parallel",),
            vmem_limit_bytes=vmem_bytes,
        ),
    )(*args)
    return jnp.sum(partials)


@functools.partial(jax.jit, static_argnames=("tm", "out_dtype", "vmem_bytes"))
def _mse_none_core(x2, y2, w_col, *, tm, out_dtype, vmem_bytes):
    rows, C = x2.shape
    grid_n = _cdiv(rows, tm)
    has_w = w_col is not None
    kernel = functools.partial(_mse_none_kernel, has_weight=has_w)
    in_specs = [pl.BlockSpec((tm, C), lambda i: (i, 0)),
                pl.BlockSpec((tm, C), lambda i: (i, 0))]
    args = (x2, y2)
    if has_w:
        in_specs.append(pl.BlockSpec((tm, 1), lambda i: (i, 0)))
        args = (x2, y2, w_col)
    return pl.pallas_call(
        kernel,
        out_shape=jax.ShapeDtypeStruct((rows, C), out_dtype),
        grid_spec=pltpu.PrefetchScalarGridSpec(
            num_scalar_prefetch=0,
            grid=(grid_n,),
            in_specs=in_specs,
            out_specs=pl.BlockSpec((tm, C), lambda i: (i, 0)),
        ),
        compiler_params=pltpu.CompilerParams(
            dimension_semantics=("parallel",),
            vmem_limit_bytes=vmem_bytes,
        ),
    )(*args)


# --------------------------------------------------------------------------- #
# Python wrapper mirroring mmcls mse_loss / MSELoss.forward
# --------------------------------------------------------------------------- #
def mse_loss_pallas(cls_score, label, weight=None, reduction="mean",
                    avg_factor=None, loss_weight=1.0):
    x = jnp.asarray(cls_score)
    y = jnp.asarray(label)
    assert x.shape == y.shape, "pred and target should be in the same shape."
    assert reduction in ("none", "mean", "sum")

    orig_shape = x.shape
    N = int(orig_shape[0]) if len(orig_shape) >= 1 else 1
    K = 1
    for d in orig_shape[1:]:
        K *= int(d)
    L = max(1, N * K)

    has_w = weight is not None
    if has_w:
        w = jnp.asarray(weight).astype(jnp.float32)
        assert w.ndim == 1 and w.shape[0] == N, \
            "weight must be a sample-wise (N,) vector"
        w_col = w.reshape(N, 1)
    else:
        w_col = None

    # ---- choose a 2-D streaming view (free reshapes, no padding copies) ---- #
    if not has_w:
        # Lane-dense repack of the flattened problem when a 128-multiple width
        # divides N*K exactly; otherwise fall back to the (N, K) view.
        Cw = None
        for c in (4096, 2048, 1024, 512, 256, 128):
            if L % c == 0:
                Cw = c
                if L // c >= 8:
                    break
        if Cw is not None:
            rows, C = L // Cw, Cw
        else:
            rows, C = N, K
    else:
        rows, C = N, K                     # per-sample weight needs (N, K)
    x2 = x.reshape(rows, C)
    y2 = y.reshape(rows, C)

    # ---- output dtype ('none' path), tiling & VMEM budget ---- #
    out_dtype = jnp.float32 if has_w else jnp.result_type(x.dtype, y.dtype)
    x_it = jnp.dtype(x.dtype).itemsize
    y_it = jnp.dtype(y.dtype).itemsize
    o_it = jnp.dtype(out_dtype).itemsize
    if reduction == "none":
        sub = _sublane_multiple(x.dtype, y.dtype, out_dtype)
    else:
        sub = _sublane_multiple(x.dtype, y.dtype)
    per_row = C * (x_it + y_it) + (4 if has_w else 0)
    if reduction == "none":
        per_row += C * o_it
    tm = _choose_tm(rows, per_row, sub)
    out_block = tm * C * o_it if reduction == "none" else C * 4
    footprint = 2 * (tm * C * (x_it + y_it) + (tm * 4 if has_w else 0) + out_block)
    vmem_bytes = int(min(64 * 1024 * 1024,
                         max(2 * footprint, 16 * 1024 * 1024)))

    if reduction == "none":
        out2 = _mse_none_core(x2, y2, w_col, tm=tm, out_dtype=out_dtype,
                              vmem_bytes=vmem_bytes)
        loss = out2.reshape(orig_shape)
        # (mmcv semantics: avg_factor is ignored for reduction='none')
    else:
        total = _mse_sum_core(x2, y2, w_col, tm=tm, vmem_bytes=vmem_bytes)
        if reduction == "sum":
            assert avg_factor is None, \
                'avg_factor can not be used with reduction="sum"'
            loss = total
        else:  # mean
            loss = total / (L if avg_factor is None else avg_factor)

    return loss_weight * loss


class MSELossPallas:
    """Stateless stand-in for mmcls MSELoss (reduction / loss_weight only)."""

    def __init__(self, reduction="mean", loss_weight=1.0):
        self.reduction = reduction
        self.loss_weight = loss_weight

    def __call__(self, cls_score, label, weight=None, avg_factor=None,
                 reduction_override=None):
        assert reduction_override in (None, "none", "mean", "sum")
        reduction = reduction_override if reduction_override else self.reduction
        return mse_loss_pallas(cls_score, label, weight,
                               reduction=reduction, avg_factor=avg_factor,
                               loss_weight=self.loss_weight)


# --------------------------------------------------------------------------- #
# Self-test
# --------------------------------------------------------------------------- #
if __name__ == "__main__":
    key = jax.random.PRNGKey(0)
    k1, k2, k3, k4, k5, k6, k7, k8 = jax.random.split(key, 8)

    loss_fn = MSELossPallas(reduction="mean", loss_weight=1.0)

    # --- 2-D case: (N, C) = (8, 32), sample weight --------------------------
    N, C = 8, 32
    cls_score = jax.random.normal(k1, (N, C), dtype=jnp.float32)
    label = jax.random.normal(k2, (N, C), dtype=jnp.float32)
    weight = jax.random.uniform(k3, (N,), dtype=jnp.float32)

    out_mean = jax.block_until_ready(loss_fn(cls_score, label, weight=weight))
    out_none = jax.block_until_ready(
        loss_fn(cls_score, label, reduction_override="none"))
    out_sum = jax.block_until_ready(
        loss_fn(cls_score, label, reduction_override="sum"))

    ref_elem = (cls_score - label) ** 2
    assert jnp.allclose(out_mean, jnp.mean(ref_elem * weight[:, None]),
                        rtol=1e-5, atol=1e-6)
    assert jnp.allclose(out_none, ref_elem, rtol=1e-5, atol=1e-6)
    assert jnp.allclose(out_sum, jnp.sum(ref_elem), rtol=1e-5, atol=1e-5)

    # --- 4-D case: (2, 4, 16, 16), mean with avg_factor ---------------------
    x4 = jax.random.normal(k4, (2, 4, 16, 16), dtype=jnp.float32)
    y4 = jax.random.normal(k5, (2, 4, 16, 16), dtype=jnp.float32)
    out4 = jax.block_until_ready(loss_fn(x4, y4, avg_factor=123.0))
    assert jnp.allclose(out4, jnp.sum((x4 - y4) ** 2) / 123.0,
                        rtol=1e-5, atol=1e-5)

    # --- bf16 in -> bf16 out on 'none'; f32 accumulation for 'sum' ----------
    xb = x4.astype(jnp.bfloat16)
    yb = y4.astype(jnp.bfloat16)
    nb = jax.block_until_ready(loss_fn(xb, yb, reduction_override="none"))
    assert nb.dtype == jnp.bfloat16
    ref_nb = ((xb.astype(jnp.float32) - yb.astype(jnp.float32)) ** 2)
    assert jnp.allclose(nb.astype(jnp.float32), ref_nb, rtol=1e-2, atol=1e-2)
    sb = jax.block_until_ready(loss_fn(xb, yb, reduction_override="sum"))
    assert jnp.allclose(sb, jnp.sum(ref_nb), rtol=1e-4, atol=1e-3)

    # --- ragged tail (rows % tm != 0), multi-tile, weighted & unweighted ----
    N2, C2 = 37, 50
    xr = jax.random.normal(k6, (N2, C2), dtype=jnp.float32)
    yr = jax.random.normal(k7, (N2, C2), dtype=jnp.float32)
    wr = jax.random.uniform(k8, (N2,), dtype=jnp.float32)
    rm = jax.block_until_ready(loss_fn(xr, yr, weight=wr))
    assert jnp.allclose(rm, jnp.mean((xr - yr) ** 2 * wr[:, None]),
                        rtol=1e-5, atol=1e-6)
    rs = jax.block_until_ready(loss_fn(xr, yr, reduction_override="sum"))
    assert jnp.allclose(rs, jnp.sum((xr - yr) ** 2), rtol=1e-5, atol=1e-5)
    rn = jax.block_until_ready(
        loss_fn(xr, yr, weight=wr, reduction_override="none"))
    assert jnp.allclose(rn, (xr - yr) ** 2 * wr[:, None], rtol=1e-5, atol=1e-6)

    print("KERNEL_OK")
</pallas_src>

<mosaic_0001>
module attributes {stable_mosaic.version = 11 : i64} {
  func.func @_mse_sum_kernel(%arg0: i32, %arg1: memref<8x32xf32, #tpu.memory_space<vmem>>, %arg2: memref<8x32xf32, #tpu.memory_space<vmem>>, %arg3: memref<8x1xf32, #tpu.memory_space<vmem>>, %arg4: memref<1x1x32xf32, #tpu.memory_space<vmem>>) attributes {dimension_semantics = [#tpu.dimension_semantics<parallel>], iteration_bounds = array<i64: 1>, scalar_prefetch = 0 : i64, scratch_operands = 0 : i64, tpu.core_type = #tpu.core_type<tc>, window_params = [{transform_indices = @transform_0, window_bounds = array<i64: 8, 32>}, {transform_indices = @transform_1, window_bounds = array<i64: 8, 32>}, {transform_indices = @transform_2, window_bounds = array<i64: 8, 1>}, {transform_indices = @transform_3, window_bounds = array<i64: 1, 1, 32>}]} {
    %c0 = arith.constant 0 : index
    %c0_0 = arith.constant 0 : index
    %0 = vector.load %arg1[%c0, %c0_0] : memref<8x32xf32, #tpu.memory_space<vmem>>, vector<8x32xf32>
    %c0_1 = arith.constant 0 : index
    %c0_2 = arith.constant 0 : index
    %1 = vector.load %arg2[%c0_1, %c0_2] : memref<8x32xf32, #tpu.memory_space<vmem>>, vector<8x32xf32>
    %2 = arith.subf %0, %1 : vector<8x32xf32>
    %3 = arith.mulf %2, %2 : vector<8x32xf32>
    %c0_3 = arith.constant 0 : index
    %c0_4 = arith.constant 0 : index
    %4 = vector.load %arg3[%c0_3, %c0_4] : memref<8x1xf32, #tpu.memory_space<vmem>>, vector<8x1xf32>
    %5 = vector.broadcast %4 : vector<8x1xf32> to vector<8x32xf32>
    %6 = arith.mulf %3, %5 : vector<8x32xf32>
    %cst = arith.constant dense<0.000000e+00> : vector<32xf32>
    %7 = vector.multi_reduction <add>, %6, %cst [0] : vector<8x32xf32> to vector<32xf32>
    %8 = vector.shape_cast %7 : vector<32xf32> to vector<1x32xf32>
    %9 = vector.shape_cast %8 : vector<1x32xf32> to vector<1x1x32xf32>
    %c0_5 = arith.constant 0 : index
    %c0_6 = arith.constant 0 : index
    %c0_7 = arith.constant 0 : index
    %10 = vector.load %arg4[%c0_5, %c0_6, %c0_7] : memref<1x1x32xf32, #tpu.memory_space<vmem>>, vector<1x1x32xf32>
    tpu.vector_store %arg4[%c0_5, %c0_6, %c0_7], %9 {strides = array<i32>} : memref<1x1x32xf32, #tpu.memory_space<vmem>>, vector<1x1x32xf32>,
    return
  }
  func.func @transform_0(%arg0: i32) -> (i32, i32) {
    %c0_i32 = arith.constant 0 : i32
    %c0_i32_0 = arith.constant 0 : i32
    return %arg0, %c0_i32 : i32, i32
  }
  func.func @transform_1(%arg0: i32) -> (i32, i32) {
    %c0_i32 = arith.constant 0 : i32
    %c0_i32_0 = arith.constant 0 : i32
    return %arg0, %c0_i32 : i32, i32
  }
  func.func @transform_2(%arg0: i32) -> (i32, i32) {
    %c0_i32 = arith.constant 0 : i32
    %c0_i32_0 = arith.constant 0 : i32
    return %arg0, %c0_i32 : i32, i32
  }
  func.func @transform_3(%arg0: i32) -> (i32, i32, i32) {
    %c0_i32 = arith.constant 0 : i32
    %c0_i32_0 = arith.constant 0 : i32
    %c0_i32_1 = arith.constant 0 : i32
    return %arg0, %c0_i32, %c0_i32_0 : i32, i32, i32
  }
}

</mosaic_0001>

<llo_original>
// kernel: _mse_sum_core.1
$region0: #{_mse_sum_core.1}
  #allocation0 [shape = 'u32[]', space=smem, size = 0x4, offset = 0x4, fixed_abs, tag = 'smem constant byte address 0x4 - core index']
  #allocation1 [shape = 'u32[144,128]{1,0:T(1,128)}', space=vmem, size = 0x12000, scoped, tag = 'internal scratch']
  %s0 = inlined_call_operand.vmem [shape: f32[8,32], index: 0, kind: input, shape index: {}]
  %s1 = inlined_call_operand.hbm [shape: f32[8,32], index: 1, kind: input, shape index: {}]
  %s2 = inlined_call_operand.vmem [shape: f32[8,1], index: 2, kind: input, shape index: {}]
  %s3 = inlined_call_operand.vmem [shape: f32[1,1,32], index: 3, kind: output, shape index: {}]
  %s4 = sld [smem:[#allocation0]]
  $region26: #{_mse_sum_core.1} parent=0
    _
  %s6 = ssub.s32 1, %s4
  %s7 = scalar_select 0, %s6, %s4
  $region1: #{_mse_sum_core.1} parent=0
    #allocation2 [shape = 'u8[4096]{0}', space=vmem, size = 0x1000, scoped, tag = 'input window, operand 1, single buffered']
    #allocation3 [shape = 's32[1]{0}', space=sflag, size = 0x4, scoped, tag = 'scoped memory for _mse_sum_core.1']
    %8 = vsyncpa [#allocation3], 0
    // Predicated region
    $region2: #{_mse_sum_core.1} parent=1 // pred_check
      _
    $region3: #{_mse_sum_core.1} parent=1 // pred_check_branch
      %10 = sbr.rel (0) target = $region5
    $region4: #{_mse_sum_core.1} parent=1 // pred_region
      _
    $region5: #{_mse_sum_core.1} parent=1 // pred_fallthru
      _
    // Predicated region
    $region6: #{_mse_sum_core.1} parent=1 // pred_check
      _
    $region7: #{_mse_sum_core.1} parent=1 // pred_check_branch
      %12 = sbr.rel (0) target = $region9
    $region8: #{_mse_sum_core.1} parent=1 // pred_region
      %s14 = ssub.s32 128, 128
      %15 = vsyncadd [#allocation3], %s14
      %s17 = sshll.u32 [#allocation2], 4
      %s18 = int_to_ptr.vmem [resolvable:$true] %s17
      %20 = dma.hbm_to_vmem [thread:$0]  %s1, 128, %s18, [#allocation3]
    $region9: #{_mse_sum_core.1} parent=1 // pred_fallthru
      _
    // Predicated region
    $region10: #{_mse_sum_core.1} parent=1 // pred_check
      _
    $region11: #{_mse_sum_core.1} parent=1 // pred_check_branch
      %22 = sbr.rel (0) target = $region13
    $region12: #{_mse_sum_core.1} parent=1 // pred_region
      _
    $region13: #{_mse_sum_core.1} parent=1 // pred_fallthru
      _
    // Predicated region
    $region14: #{_mse_sum_core.1} parent=1 // pred_check
      _
    $region15: #{_mse_sum_core.1} parent=1 // pred_check_branch
      %24 = sbr.rel (0) target = $region17
    $region16: #{_mse_sum_core.1} parent=1 // pred_region
      %25 = dma.done [#allocation3], 128
    $region17: #{_mse_sum_core.1} parent=1 // pred_fallthru
      _
    %v26 = vld [vmem:[%s0] sm:$0xff]
    %v27 = vld [vmem:[#allocation2] sm:$0xff]
    %v28 = vsub.f32 %v26, %v27
    %v29 = vmul.f32 %v28, %v28
    %v30 = vld [vmem:[%s2] sm:$0xff]
    %32 = vset.pattern.permute.xlu0 0
    %33 = vperm.xlu0 %32, %v30
    %v34 = vpop.permute.xlu0 %33
    %v36 = vmul.f32 %v29, %v34
    %vm37 = vcmask 261120
    %v38 = vsel %vm37, %v36, 0.0
    %v39 = vrot.slane %v38, 4
    %v40 = vadd.f32 %v38, %v39
    %v41 = vrot.slane %v40, 2
    %v42 = vadd.f32 %v40, %v41
    %v43 = vrot.slane %v42, 1
    %v44 = vadd.f32 %v42, %v43
    %vm45 = vcmask 253952
    %46 = vst.msk [vmem:[%s3] sm:$0x1] %vm45, %v44
    // Predicated region
    $region18: #{_mse_sum_core.1} parent=1 // pred_check
      _
    $region19: #{_mse_sum_core.1} parent=1 // pred_check_branch
      %48 = sbr.rel (0) target = $region21
    $region20: #{_mse_sum_core.1} parent=1 // pred_region
      _
    $region21: #{_mse_sum_core.1} parent=1 // pred_fallthru
      _
    // Predicated region
    $region22: #{_mse_sum_core.1} parent=1 // pred_check
      _
    $region23: #{_mse_sum_core.1} parent=1 // pred_check_branch
      %50 = sbr.rel (0) target = $region25
    $region24: #{_mse_sum_core.1} parent=1 // pred_region
      _
    $region25: #{_mse_sum_core.1} parent=1 // pred_fallthru
      _
    %51 = vsyncpa [#allocation3], 1

</llo_original>
